<compile_context>
chip_gen: v7x
topology: tpu7x:2x2x1
jax: 0.10.0
libtpu: 0.0.40
codegen_flags: <defaults>
</compile_context>

<pallas_src>
import jax
import jax.numpy as jnp
from jax.experimental import pallas as pl
from jax.experimental.pallas import tpu as pltpu


# ----------------------------------------------------------------------------
# Kernels
# ----------------------------------------------------------------------------
def _linear_kernel_fullk(x_ref, w_ref, b_ref, o_ref):
    """One (tm, tn) output tile; whole K in one block (no reduction axis)."""
    acc = jnp.dot(
        x_ref[...].astype(jnp.bfloat16),  # in-VMEM cast; x stays f32 in HBM
        w_ref[...],
        preferred_element_type=jnp.float32,
    )
    o_ref[...] = (acc + b_ref[...]).astype(o_ref.dtype)


def _linear_kernel_ktiled(x_ref, w_ref, b_ref, o_ref, acc_ref):
    """One (tm, tn) output tile, accumulated over the K grid axis."""
    k = pl.program_id(2)

    @pl.when(k == 0)
    def _():
        # Fold the bias into the accumulator init (saves an epilogue add).
        acc_ref[...] = jnp.broadcast_to(
            b_ref[...], acc_ref.shape
        ).astype(jnp.float32)

    acc_ref[...] += jnp.dot(
        x_ref[...].astype(jnp.bfloat16),
        w_ref[...],
        preferred_element_type=jnp.float32,
    )

    @pl.when(k == pl.num_programs(2) - 1)
    def _():
        o_ref[...] = acc_ref[...].astype(o_ref.dtype)


# ----------------------------------------------------------------------------
# Wrapper
# ----------------------------------------------------------------------------
def _pick_tile(dim, target):
    """Largest 128-multiple <= target that divides dim (or dim itself)."""
    if dim <= target:
        return dim
    t = (target // 128) * 128
    while t >= 128:
        if dim % t == 0:
            return t
        t -= 128
    return dim


def _vmem_bytes(tm, tn, tk, *, x_bytes, w_bytes, out_bytes, with_acc):
    # Double-buffered inputs + double-buffered output + optional f32 acc.
    ins = 2 * (tm * tk * x_bytes + tk * tn * w_bytes + 1 * tn * 4)
    outs = 2 * tm * tn * out_bytes
    acc = tm * tn * 4 if with_acc else 0
    return ins + outs + acc


def inner_linear(x, w_bf16, b, *, tm=512, tn=512, tk=1024,
                 out_dtype=jnp.bfloat16):
    """Pallas-backed inner module: out = x @ w + b.

    x:      [M, K] f32 (cast to bf16 inside the kernel, in VMEM)
    w_bf16: [K, N] bf16 (persisted in bf16 once, outside the hot path)
    b:      [1, N] f32 (added in the f32 epilogue / accumulator init)
    """
    M, K = x.shape
    K2, N = w_bf16.shape
    assert K == K2 and b.shape == (1, N)

    tm = _pick_tile(M, tm)
    tn = _pick_tile(N, tn)

    b_f32 = b.astype(jnp.float32)
    out_bytes = jnp.dtype(out_dtype).itemsize

    # Prefer the full-K path (no reduction grid axis) when it fits VMEM.
    fullk_vmem = _vmem_bytes(tm, tn, K, x_bytes=4, w_bytes=2,
                             out_bytes=out_bytes, with_acc=False)
    use_fullk = fullk_vmem <= 12 * (1 << 20)   # stay well under v5e's 16 MiB

    if use_fullk:
        tk = K
        grid = (M // tm, N // tn)
        g_m, g_n, g_k = grid[0], grid[1], 1
        in_specs = [
            pl.BlockSpec((tm, tk), lambda i, j: (i, 0)),
            pl.BlockSpec((tk, tn), lambda i, j: (0, j)),
            pl.BlockSpec((1, tn), lambda i, j: (0, j)),
        ]
        out_specs = pl.BlockSpec((tm, tn), lambda i, j: (i, j))
        scratch_shapes = []
        kernel = _linear_kernel_fullk
        dim_sem = ("parallel", "parallel")
        vmem_needed = fullk_vmem
    else:
        tk = _pick_tile(K, tk)
        grid = (M // tm, N // tn, K // tk)
        g_m, g_n, g_k = grid
        in_specs = [
            pl.BlockSpec((tm, tk), lambda i, j, k: (i, k)),
            pl.BlockSpec((tk, tn), lambda i, j, k: (k, j)),
            pl.BlockSpec((1, tn), lambda i, j, k: (0, j)),
        ]
        out_specs = pl.BlockSpec((tm, tn), lambda i, j, k: (i, j))
        scratch_shapes = [pltpu.VMEM((tm, tn), jnp.float32)]
        kernel = _linear_kernel_ktiled
        dim_sem = ("parallel", "parallel", "arbitrary")
        vmem_needed = _vmem_bytes(tm, tn, tk, x_bytes=4, w_bytes=2,
                                  out_bytes=out_bytes, with_acc=True)

    # HBM traffic including tiled re-reads: x re-read g_n times, w g_m times.
    cost = pl.CostEstimate(
        flops=2 * M * N * K,
        transcendentals=0,
        bytes_accessed=(M * K * 4 * g_n
                        + K * N * 2 * g_m
                        + N * 4 * g_m * g_n
                        + M * N * out_bytes),
    )

    # Only raise the scoped-VMEM limit if the default (16 MiB on v5e) would be
    # too tight; cap at 32 MiB so it stays safe on v7x (64 MiB physical).
    compiler_kwargs = {"dimension_semantics": dim_sem}
    if vmem_needed > 14 * (1 << 20):
        compiler_kwargs["vmem_limit_bytes"] = min(
            int(vmem_needed * 1.25), 32 * (1 << 20)
        )

    return pl.pallas_call(
        kernel,
        out_shape=jax.ShapeDtypeStruct((M, N), out_dtype),
        grid_spec=pltpu.PrefetchScalarGridSpec(
            num_scalar_prefetch=0,
            grid=grid,
            in_specs=in_specs,
            out_specs=out_specs,
            scratch_shapes=scratch_shapes,
        ),
        compiler_params=pltpu.CompilerParams(**compiler_kwargs),
        cost_estimate=cost,
    )(x, w_bf16, b_f32)


def R_forward(tpl, w_bf16, b):
    """Equivalent of R.forward: apply inner to tuple[0], pass the rest along."""
    x, rest = tpl[0], tpl[1:]
    out = inner_linear(x, w_bf16, b)
    return (out,) + rest


# ----------------------------------------------------------------------------
# Demo / self-test
# ----------------------------------------------------------------------------
if __name__ == "__main__":
    key = jax.random.PRNGKey(0)
    k_x, k_w, k_b, k_r1, k_r2 = jax.random.split(key, 5)

    # Lane/row-dense shapes (multiples of 128); 256x256 collapses to a single
    # grid step with full-array blocks (per perf review).
    seq, hidden = 256, 256

    # Parameters: weight persisted in bf16 once (outside the hot path).
    w_bf16 = (jax.random.normal(k_w, (hidden, hidden), dtype=jnp.float32)
              * 0.02).astype(jnp.bfloat16)
    b = jax.random.normal(k_b, (1, hidden), dtype=jnp.float32) * 0.01

    # Input tuple: (x, extra_reward, extra_mask) — extras pass through untouched.
    x = jax.random.normal(k_x, (seq, hidden), dtype=jnp.float32)
    rewards = jax.random.normal(k_r1, (seq,), dtype=jnp.float32)
    mask = (jax.random.uniform(k_r2, (seq,)) > 0.5).astype(jnp.float32)

    out_tuple = R_forward((x, rewards, mask), w_bf16, b)

    # Block on all outputs.
    for t in out_tuple:
        jax.block_until_ready(t)

    # Sanity: pass-through elements identical; kernel matches bf16 reference.
    x_bf = x.astype(jnp.bfloat16).astype(jnp.float32)
    w_f = w_bf16.astype(jnp.float32)
    ref = x_bf @ w_f + b
    got = out_tuple[0].astype(jnp.float32)
    assert out_tuple[0].shape == (seq, hidden)
    assert out_tuple[0].dtype == jnp.bfloat16
    assert jnp.allclose(got, ref, atol=2e-2, rtol=2e-2)
    assert jnp.array_equal(out_tuple[1], rewards)
    assert jnp.array_equal(out_tuple[2], mask)

    print("KERNEL_OK")
</pallas_src>

<mosaic_0001>
module attributes {stable_mosaic.version = 11 : i64} {
  func.func @_linear_kernel_fullk(%arg0: i32, %arg1: i32, %arg2: memref<256x256xf32, #tpu.memory_space<vmem>>, %arg3: memref<256x256xbf16, #tpu.memory_space<vmem>>, %arg4: memref<1x256xf32, #tpu.memory_space<vmem>>, %arg5: memref<256x256xbf16, #tpu.memory_space<vmem>>) attributes {dimension_semantics = [#tpu.dimension_semantics<parallel>, #tpu.dimension_semantics<parallel>], iteration_bounds = array<i64: 1, 1>, scalar_prefetch = 0 : i64, scratch_operands = 0 : i64, tpu.core_type = #tpu.core_type<tc>, window_params = [{transform_indices = @transform_0, window_bounds = array<i64: 256, 256>}, {transform_indices = @transform_1, window_bounds = array<i64: 256, 256>}, {transform_indices = @transform_2, window_bounds = array<i64: 1, 256>}, {transform_indices = @transform_3, window_bounds = array<i64: 256, 256>}]} {
    %c0 = arith.constant 0 : index
    %c0_0 = arith.constant 0 : index
    %0 = vector.load %arg2[%c0, %c0_0] : memref<256x256xf32, #tpu.memory_space<vmem>>, vector<256x256xf32>
    %1 = arith.truncf %0 : vector<256x256xf32> to vector<256x256xbf16>
    %c0_1 = arith.constant 0 : index
    %c0_2 = arith.constant 0 : index
    %2 = vector.load %arg3[%c0_1, %c0_2] : memref<256x256xbf16, #tpu.memory_space<vmem>>, vector<256x256xbf16>
    %cst = arith.constant dense<0.000000e+00> : vector<256x256xf32>
    %3 = tpu.matmul %1, %2, %cst {dimension_numbers = #tpu.dot_dimension_numbers<[1], [0], [0], [1], [0, 0, 1, 1], [], []>} : vector<256x256xbf16>, vector<256x256xbf16>, vector<256x256xf32> -> vector<256x256xf32>
    %c0_3 = arith.constant 0 : index
    %c0_4 = arith.constant 0 : index
    %4 = vector.load %arg4[%c0_3, %c0_4] : memref<1x256xf32, #tpu.memory_space<vmem>>, vector<1x256xf32>
    %5 = vector.broadcast %4 : vector<1x256xf32> to vector<256x256xf32>
    %6 = arith.addf %3, %5 : vector<256x256xf32>
    %7 = arith.truncf %6 : vector<256x256xf32> to vector<256x256xbf16>
    %c0_5 = arith.constant 0 : index
    %c0_6 = arith.constant 0 : index
    %8 = vector.load %arg5[%c0_5, %c0_6] : memref<256x256xbf16, #tpu.memory_space<vmem>>, vector<256x256xbf16>
    tpu.vector_store %arg5[%c0_5, %c0_6], %7 {strides = array<i32>} : memref<256x256xbf16, #tpu.memory_space<vmem>>, vector<256x256xbf16>,
    return
  }
  func.func @transform_0(%arg0: i32, %arg1: i32) -> (i32, i32) {
    %c0_i32 = arith.constant 0 : i32
    %c0_i32_0 = arith.constant 0 : i32
    return %arg0, %c0_i32 : i32, i32
  }
  func.func @transform_1(%arg0: i32, %arg1: i32) -> (i32, i32) {
    %c0_i32 = arith.constant 0 : i32
    %c0_i32_0 = arith.constant 0 : i32
    return %c0_i32, %arg1 : i32, i32
  }
  func.func @transform_2(%arg0: i32, %arg1: i32) -> (i32, i32) {
    %c0_i32 = arith.constant 0 : i32
    %c0_i32_0 = arith.constant 0 : i32
    return %c0_i32, %arg1 : i32, i32
  }
  func.func @transform_3(%arg0: i32, %arg1: i32) -> (i32, i32) {
    %c0_i32 = arith.constant 0 : i32
    return %arg0, %arg1 : i32, i32
  }
}

</mosaic_0001>

<llo_original>
// kernel: tpu_custom_call.1
$region0: #{tpu_custom_call.1}
  #allocation0 [shape = 'u32[]', space=smem, size = 0x4, offset = 0x4, fixed_abs, tag = 'smem constant byte address 0x4 - core index']
  #allocation1 [shape = 'u32[144,128]{1,0:T(1,128)}', space=vmem, size = 0x12000, scoped, tag = 'internal scratch']
  %s0 = inlined_call_operand.hbm [shape: f32[256,256], index: 0, kind: input, shape index: {}]
  %s1 = inlined_call_operand.hbm [shape: bf16[256,256], index: 1, kind: input, shape index: {}]
  %s2 = inlined_call_operand.vmem [shape: f32[1,256], index: 2, kind: input, shape index: {}]
  %s3 = inlined_call_operand.hbm [shape: bf16[256,256], index: 3, kind: output, shape index: {}]
  %s4 = sld [smem:[#allocation0]]
  $region30: #{tpu_custom_call.1} parent=0
    _
  %s6 = ssub.s32 1, %s4
  %s7 = scalar_select 0, %s6, %s4
  $region1: #{tpu_custom_call.1} parent=0
    #allocation2 [shape = 'u8[262144]{0}', space=vmem, size = 0x40000, scoped, tag = 'input window, operand 0, single buffered']
    #allocation3 [shape = 's32[1]{0}', space=sflag, size = 0x4, scoped, tag = 'scoped memory for tpu_custom_call.1']
    #allocation4 [shape = 's32[1]{0}', space=sflag, size = 0x4, scoped, tag = 'scoped memory for tpu_custom_call.1']
    #allocation5 [shape = 'u8[131072]{0}', space=vmem, size = 0x20000, scoped, tag = 'input window, operand 1, single buffered']
    #allocation6 [shape = 's32[1]{0}', space=sflag, size = 0x4, scoped, tag = 'scoped memory for tpu_custom_call.1']
    #allocation7 [shape = 'u8[131072]{0}', space=vmem, size = 0x20000, scoped, tag = 'output window, operand 0, single buffered']
    %8 = vsyncpa [#allocation3], 0
    %9 = vsyncpa [#allocation6], 0
    %10 = vsyncpa [#allocation4], 0
    // Predicated region
    $region2: #{tpu_custom_call.1} parent=1 // pred_check
      _
    $region3: #{tpu_custom_call.1} parent=1 // pred_check_branch
      %12 = sbr.rel (0) target = $region5
    $region4: #{tpu_custom_call.1} parent=1 // pred_region
      %s14 = ssub.s32 8192, 8192
      %15 = vsyncadd [#allocation3], %s14
      %s16 = sshll.u32 [#allocation2], 4
      %s17 = int_to_ptr.vmem [resolvable:$true] %s16
      %22 = dma.hbm_to_vmem [thread:$0]  %s0, 8192, %s17, [#allocation3], 256, 256, 16
    $region5: #{tpu_custom_call.1} parent=1 // pred_fallthru
      _
    // Predicated region
    $region6: #{tpu_custom_call.1} parent=1 // pred_check
      _
    $region7: #{tpu_custom_call.1} parent=1 // pred_check_branch
      %24 = sbr.rel (0) target = $region9
    $region8: #{tpu_custom_call.1} parent=1 // pred_region
      %s26 = ssub.s32 4096, 4096
      %27 = vsyncadd [#allocation6], %s26
      %s28 = sshll.u32 [#allocation5], 4
      %s29 = int_to_ptr.vmem [resolvable:$true] %s28
      %34 = dma.hbm_to_vmem [thread:$0]  %s1, 4096, %s29, [#allocation6], 128, 128, 8
    $region9: #{tpu_custom_call.1} parent=1 // pred_fallthru
      _
    // Predicated region
    $region10: #{tpu_custom_call.1} parent=1 // pred_check
      _
    $region11: #{tpu_custom_call.1} parent=1 // pred_check_branch
      %36 = sbr.rel (0) target = $region13
    $region12: #{tpu_custom_call.1} parent=1 // pred_region
      _
    $region13: #{tpu_custom_call.1} parent=1 // pred_fallthru
      _
    // Predicated region
    $region14: #{tpu_custom_call.1} parent=1 // pred_check
      _
    $region15: #{tpu_custom_call.1} parent=1 // pred_check_branch
      %38 = sbr.rel (0) target = $region17
    $region16: #{tpu_custom_call.1} parent=1 // pred_region
      %39 = dma.done [#allocation3], 8192
    $region17: #{tpu_custom_call.1} parent=1 // pred_fallthru
      _
    // Predicated region
    $region18: #{tpu_custom_call.1} parent=1 // pred_check
      _
    $region19: #{tpu_custom_call.1} parent=1 // pred_check_branch
      %41 = sbr.rel (0) target = $region21
    $region20: #{tpu_custom_call.1} parent=1 // pred_region
      %42 = dma.done [#allocation6], 4096
    $region21: #{tpu_custom_call.1} parent=1 // pred_fallthru
      _
    %v43 = vld [vmem:[#allocation2] sm:$0xff]
    %v44 = vld [vmem:[#allocation2 + $0x8] sm:$0xff]
    %v45 = vld [vmem:[#allocation2 + $0x10] sm:$0xff]
    %v46 = vld [vmem:[#allocation2 + $0x18] sm:$0xff]
    %v47 = vld [vmem:[#allocation2 + $0x20] sm:$0xff]
    %v48 = vld [vmem:[#allocation2 + $0x28] sm:$0xff]
    %v49 = vld [vmem:[#allocation2 + $0x30] sm:$0xff]
    %v50 = vld [vmem:[#allocation2 + $0x38] sm:$0xff]
    %v51 = vld [vmem:[#allocation2 + $0x40] sm:$0xff]
    %v52 = vld [vmem:[#allocation2 + $0x48] sm:$0xff]
    %v53 = vld [vmem:[#allocation2 + $0x50] sm:$0xff]
    %v54 = vld [vmem:[#allocation2 + $0x58] sm:$0xff]
    %v55 = vld [vmem:[#allocation2 + $0x60] sm:$0xff]
    %v56 = vld [vmem:[#allocation2 + $0x68] sm:$0xff]
    %v57 = vld [vmem:[#allocation2 + $0x70] sm:$0xff]
    %v58 = vld [vmem:[#allocation2 + $0x78] sm:$0xff]
    %v59 = vld [vmem:[#allocation2 + $0x80] sm:$0xff]
    %v60 = vld [vmem:[#allocation2 + $0x88] sm:$0xff]
    %v61 = vld [vmem:[#allocation2 + $0x90] sm:$0xff]
    %v62 = vld [vmem:[#allocation2 + $0x98] sm:$0xff]
    %v63 = vld [vmem:[#allocation2 + $0xa0] sm:$0xff]
    %v64 = vld [vmem:[#allocation2 + $0xa8] sm:$0xff]
    %v65 = vld [vmem:[#allocation2 + $0xb0] sm:$0xff]
    %v66 = vld [vmem:[#allocation2 + $0xb8] sm:$0xff]
    %v67 = vld [vmem:[#allocation2 + $0xc0] sm:$0xff]
    %v68 = vld [vmem:[#allocation2 + $0xc8] sm:$0xff]
    %v69 = vld [vmem:[#allocation2 + $0xd0] sm:$0xff]
    %v70 = vld [vmem:[#allocation2 + $0xd8] sm:$0xff]
    %v71 = vld [vmem:[#allocation2 + $0xe0] sm:$0xff]
    %v72 = vld [vmem:[#allocation2 + $0xe8] sm:$0xff]
    %v73 = vld [vmem:[#allocation2 + $0xf0] sm:$0xff]
    %v74 = vld [vmem:[#allocation2 + $0xf8] sm:$0xff]
    %v75 = vld [vmem:[#allocation2 + $0x100] sm:$0xff]
    %v76 = vld [vmem:[#allocation2 + $0x108] sm:$0xff]
    %v77 = vld [vmem:[#allocation2 + $0x110] sm:$0xff]
    %v78 = vld [vmem:[#allocation2 + $0x118] sm:$0xff]
    %v79 = vld [vmem:[#allocation2 + $0x120] sm:$0xff]
    %v80 = vld [vmem:[#allocation2 + $0x128] sm:$0xff]
    %v81 = vld [vmem:[#allocation2 + $0x130] sm:$0xff]
    %v82 = vld [vmem:[#allocation2 + $0x138] sm:$0xff]
    %v83 = vld [vmem:[#allocation2 + $0x140] sm:$0xff]
    %v84 = vld [vmem:[#allocation2 + $0x148] sm:$0xff]
    %v85 = vld [vmem:[#allocation2 + $0x150] sm:$0xff]
    %v86 = vld [vmem:[#allocation2 + $0x158] sm:$0xff]
    %v87 = vld [vmem:[#allocation2 + $0x160] sm:$0xff]
    %v88 = vld [vmem:[#allocation2 + $0x168] sm:$0xff]
    %v89 = vld [vmem:[#allocation2 + $0x170] sm:$0xff]
    %v90 = vld [vmem:[#allocation2 + $0x178] sm:$0xff]
    %v91 = vld [vmem:[#allocation2 + $0x180] sm:$0xff]
    %v92 = vld [vmem:[#allocation2 + $0x188] sm:$0xff]
    %v93 = vld [vmem:[#allocation2 + $0x190] sm:$0xff]
    %v94 = vld [vmem:[#allocation2 + $0x198] sm:$0xff]
    %v95 = vld [vmem:[#allocation2 + $0x1a0] sm:$0xff]
    %v96 = vld [vmem:[#allocation2 + $0x1a8] sm:$0xff]
    %v97 = vld [vmem:[#allocation2 + $0x1b0] sm:$0xff]
    %v98 = vld [vmem:[#allocation2 + $0x1b8] sm:$0xff]
    %v99 = vld [vmem:[#allocation2 + $0x1c0] sm:$0xff]
    %v100 = vld [vmem:[#allocation2 + $0x1c8] sm:$0xff]
    %v101 = vld [vmem:[#allocation2 + $0x1d0] sm:$0xff]
    %v102 = vld [vmem:[#allocation2 + $0x1d8] sm:$0xff]
    %v103 = vld [vmem:[#allocation2 + $0x1e0] sm:$0xff]
    %v104 = vld [vmem:[#allocation2 + $0x1e8] sm:$0xff]
    %v105 = vld [vmem:[#allocation2 + $0x1f0] sm:$0xff]
    %v106 = vld [vmem:[#allocation2 + $0x1f8] sm:$0xff]
    %v107 = vpack.c.bf16 %v45, %v43
    %v108 = vpack.c.bf16 %v46, %v44
    %v109 = vpack.c.bf16 %v49, %v47
    %v110 = vpack.c.bf16 %v50, %v48
    %v111 = vpack.c.bf16 %v53, %v51
    %v112 = vpack.c.bf16 %v54, %v52
    %v113 = vpack.c.bf16 %v57, %v55
    %v114 = vpack.c.bf16 %v58, %v56
    %v115 = vpack.c.bf16 %v61, %v59
    %v116 = vpack.c.bf16 %v62, %v60
    %v117 = vpack.c.bf16 %v65, %v63
    %v118 = vpack.c.bf16 %v66, %v64
    %v119 = vpack.c.bf16 %v69, %v67
    %v120 = vpack.c.bf16 %v70, %v68
    %v121 = vpack.c.bf16 %v73, %v71
    %v122 = vpack.c.bf16 %v74, %v72
    %v123 = vpack.c.bf16 %v77, %v75
    %v124 = vpack.c.bf16 %v78, %v76
    %v125 = vpack.c.bf16 %v81, %v79
    %v126 = vpack.c.bf16 %v82, %v80
    %v127 = vpack.c.bf16 %v85, %v83
    %v128 = vpack.c.bf16 %v86, %v84
    %v129 = vpack.c.bf16 %v89, %v87
    %v130 = vpack.c.bf16 %v90, %v88
    %v131 = vpack.c.bf16 %v93, %v91
    %v132 = vpack.c.bf16 %v94, %v92
    %v133 = vpack.c.bf16 %v97, %v95
    %v134 = vpack.c.bf16 %v98, %v96
    %v135 = vpack.c.bf16 %v101, %v99
    %v136 = vpack.c.bf16 %v102, %v100
    %v137 = vpack.c.bf16 %v105, %v103
    %v138 = vpack.c.bf16 %v106, %v104
    %v139 = vld [vmem:[#allocation5] sm:$0xff]
    %v140 = vld [vmem:[#allocation5 + $0x8] sm:$0xff]
    %v141 = vld [vmem:[#allocation5 + $0x10] sm:$0xff]
    %v142 = vld [vmem:[#allocation5 + $0x18] sm:$0xff]
    %v143 = vld [vmem:[#allocation5 + $0x20] sm:$0xff]
    %v144 = vld [vmem:[#allocation5 + $0x28] sm:$0xff]
    %v145 = vld [vmem:[#allocation5 + $0x30] sm:$0xff]
    %v146 = vld [vmem:[#allocation5 + $0x38] sm:$0xff]
    %v147 = vld [vmem:[#allocation5 + $0x40] sm:$0xff]
    %v148 = vld [vmem:[#allocation5 + $0x48] sm:$0xff]
    %v149 = vld [vmem:[#allocation5 + $0x50] sm:$0xff]
    %v150 = vld [vmem:[#allocation5 + $0x58] sm:$0xff]
    %v151 = vld [vmem:[#allocation5 + $0x60] sm:$0xff]
    %v152 = vld [vmem:[#allocation5 + $0x68] sm:$0xff]
    %v153 = vld [vmem:[#allocation5 + $0x70] sm:$0xff]
    %v154 = vld [vmem:[#allocation5 + $0x78] sm:$0xff]
    %v155 = vld [vmem:[#allocation5 + $0x80] sm:$0xff]
    %v156 = vld [vmem:[#allocation5 + $0x88] sm:$0xff]
    %v157 = vld [vmem:[#allocation5 + $0x90] sm:$0xff]
    %v158 = vld [vmem:[#allocation5 + $0x98] sm:$0xff]
    %v159 = vld [vmem:[#allocation5 + $0xa0] sm:$0xff]
    %v160 = vld [vmem:[#allocation5 + $0xa8] sm:$0xff]
    %v161 = vld [vmem:[#allocation5 + $0xb0] sm:$0xff]
    %v162 = vld [vmem:[#allocation5 + $0xb8] sm:$0xff]
    %v163 = vld [vmem:[#allocation5 + $0xc0] sm:$0xff]
    %v164 = vld [vmem:[#allocation5 + $0xc8] sm:$0xff]
    %v165 = vld [vmem:[#allocation5 + $0xd0] sm:$0xff]
    %v166 = vld [vmem:[#allocation5 + $0xd8] sm:$0xff]
    %v167 = vld [vmem:[#allocation5 + $0xe0] sm:$0xff]
    %v168 = vld [vmem:[#allocation5 + $0xe8] sm:$0xff]
    %v169 = vld [vmem:[#allocation5 + $0xf0] sm:$0xff]
    %v170 = vld [vmem:[#allocation5 + $0xf8] sm:$0xff]
    %v171 = vld [vmem:[%s2] sm:$0x3]
    %v173 = vlaneseq
    %v174 = vshrl.u32 %v173, 7
    %v175 = vsub.s32 0, %v174
    %v176 = vrot.slane %v171, %v175
    %v177 = vlaneseq
    %v178 = vshrl.u32 %v177, 7
    %v179 = vsub.s32 1, %v178
    %v180 = vrot.slane %v171, %v179
    %v215 = vunpack.c.l.b16 %v139
    %v216 = vunpack.c.h.b16 %v139
    %v217 = vunpack.c.l.b16 %v140
    %v218 = vunpack.c.h.b16 %v140
    %v219 = vunpack.c.l.b16 %v141
    %v220 = vunpack.c.h.b16 %v141
    %v221 = vunpack.c.l.b16 %v142
    %v222 = vunpack.c.h.b16 %v142
    %v223 = vunpack.c.l.b16 %v143
    %v224 = vunpack.c.h.b16 %v143
    %v225 = vunpack.c.l.b16 %v144
    %v226 = vunpack.c.h.b16 %v144
    %v227 = vunpack.c.l.b16 %v145
    %v228 = vunpack.c.h.b16 %v145
    %v229 = vunpack.c.l.b16 %v146
    %v230 = vunpack.c.h.b16 %v146
    %v231 = vunpack.c.l.b16 %v147
    %v232 = vunpack.c.h.b16 %v147
    %v233 = vunpack.c.l.b16 %v148
    %v234 = vunpack.c.h.b16 %v148
    %v235 = vunpack.c.l.b16 %v149
    %v236 = vunpack.c.h.b16 %v149
    %v237 = vunpack.c.l.b16 %v150
    %v238 = vunpack.c.h.b16 %v150
    %v239 = vunpack.c.l.b16 %v151
    %v240 = vunpack.c.h.b16 %v151
    %v241 = vunpack.c.l.b16 %v152
    %v242 = vunpack.c.h.b16 %v152
    %v243 = vunpack.c.l.b16 %v153
    %v244 = vunpack.c.h.b16 %v153
    %v245 = vunpack.c.l.b16 %v154
    %v246 = vunpack.c.h.b16 %v154
    %v247 = vunpack.c.l.b16 %v155
    %v248 = vunpack.c.h.b16 %v155
    %v249 = vunpack.c.l.b16 %v156
    %v250 = vunpack.c.h.b16 %v156
    %v251 = vunpack.c.l.b16 %v157
    %v252 = vunpack.c.h.b16 %v157
    %v253 = vunpack.c.l.b16 %v158
    %v254 = vunpack.c.h.b16 %v158
    %v255 = vunpack.c.l.b16 %v159
    %v256 = vunpack.c.h.b16 %v159
    %v257 = vunpack.c.l.b16 %v160
    %v258 = vunpack.c.h.b16 %v160
    %v259 = vunpack.c.l.b16 %v161
    %v260 = vunpack.c.h.b16 %v161
    %v261 = vunpack.c.l.b16 %v162
    %v262 = vunpack.c.h.b16 %v162
    %v263 = vunpack.c.l.b16 %v163
    %v264 = vunpack.c.h.b16 %v163
    %v265 = vunpack.c.l.b16 %v164
    %v266 = vunpack.c.h.b16 %v164
    %v267 = vunpack.c.l.b16 %v165
    %v268 = vunpack.c.h.b16 %v165
    %v269 = vunpack.c.l.b16 %v166
    %v270 = vunpack.c.h.b16 %v166
    %v271 = vunpack.c.l.b16 %v167
    %v272 = vunpack.c.h.b16 %v167
    %v273 = vunpack.c.l.b16 %v168
    %v274 = vunpack.c.h.b16 %v168
    %v275 = vunpack.c.l.b16 %v169
    %v276 = vunpack.c.h.b16 %v169
    %v277 = vunpack.c.l.b16 %v170
    %v278 = vunpack.c.h.b16 %v170
    %v279 = vpack.c.b16 %v217, %v215
    %v280 = vpack.c.b16 %v218, %v216
    %v281 = vpack.c.b16 %v221, %v219
    %v282 = vpack.c.b16 %v222, %v220
    %v283 = vpack.c.b16 %v225, %v223
    %v284 = vpack.c.b16 %v226, %v224
    %v285 = vpack.c.b16 %v229, %v227
    %v286 = vpack.c.b16 %v230, %v228
    %v287 = vpack.c.b16 %v233, %v231
    %v288 = vpack.c.b16 %v234, %v232
    %v289 = vpack.c.b16 %v237, %v235
    %v290 = vpack.c.b16 %v238, %v236
    %v291 = vpack.c.b16 %v241, %v239
    %v292 = vpack.c.b16 %v242, %v240
    %v293 = vpack.c.b16 %v245, %v243
    %v294 = vpack.c.b16 %v246, %v244
    %v295 = vpack.c.b16 %v249, %v247
    %v296 = vpack.c.b16 %v250, %v248
    %v297 = vpack.c.b16 %v253, %v251
    %v298 = vpack.c.b16 %v254, %v252
    %v299 = vpack.c.b16 %v257, %v255
    %v300 = vpack.c.b16 %v258, %v256
    %v301 = vpack.c.b16 %v261, %v259
    %v302 = vpack.c.b16 %v262, %v260
    %v303 = vpack.c.b16 %v265, %v263
    %v304 = vpack.c.b16 %v266, %v264
    %v305 = vpack.c.b16 %v269, %v267
    %v306 = vpack.c.b16 %v270, %v268
    %v307 = vpack.c.b16 %v273, %v271
    %v308 = vpack.c.b16 %v274, %v272
    %v309 = vpack.c.b16 %v277, %v275
    %v310 = vpack.c.b16 %v278, %v276
    %343 = vmatprep.subr.bf16.mxu0 %v280
    %344 = vmatpush1.bf16.msra.mxu0 %v279
    %345 = vmatprep.subr.bf16.mxu0 %v282
    %346 = vmatpush1.bf16.msra.mxu0 %v281
    %347 = vmatprep.subr.bf16.mxu0 %v284
    %348 = vmatpush1.bf16.msra.mxu0 %v283
    %349 = vmatprep.subr.bf16.mxu0 %v286
    %350 = vmatpush1.bf16.msra.mxu0 %v285
    %351 = vmatprep.subr.bf16.mxu0 %v288
    %352 = vmatpush1.bf16.msra.mxu0 %v287
    %353 = vmatprep.subr.bf16.mxu0 %v290
    %354 = vmatpush1.bf16.msra.mxu0 %v289
    %355 = vmatprep.subr.bf16.mxu0 %v292
    %356 = vmatpush1.bf16.msra.mxu0 %v291
    %357 = vmatprep.subr.bf16.mxu0 %v294
    %358 = vmatpush1.bf16.msra.mxu0 %v293
    %359 = vmatprep.subr.bf16.mxu0 %v296
    %360 = vmatpush1.bf16.msra.mxu0 %v295
    %361 = vmatprep.subr.bf16.mxu0 %v298
    %362 = vmatpush1.bf16.msra.mxu0 %v297
    %363 = vmatprep.subr.bf16.mxu0 %v300
    %364 = vmatpush1.bf16.msra.mxu0 %v299
    %365 = vmatprep.subr.bf16.mxu0 %v302
    %366 = vmatpush1.bf16.msra.mxu0 %v301
    %367 = vmatprep.subr.bf16.mxu0 %v304
    %368 = vmatpush1.bf16.msra.mxu0 %v303
    %369 = vmatprep.subr.bf16.mxu0 %v306
    %370 = vmatpush1.bf16.msra.mxu0 %v305
    %371 = vmatprep.subr.bf16.mxu0 %v308
    %372 = vmatpush1.bf16.msra.mxu0 %v307
    %373 = vmatprep.subr.bf16.mxu0 %v310
    %374 = vmatpush1.bf16.msra.mxu0 %v309
    %375 = vmatprep.mubr.bf16.mxu0 %v108
    %376 = vmatmul.mubr.bf16.gmra.mrb[0].mxu0 %v107
    %v377 = vpop.f32.mrb[0].mxu0
    %v378 = vadd.f32 %v176, %v377
    %v379 = vpop.f32.mrb[0].mxu0
    %v380 = vadd.f32 %v180, %v379
    %v381 = vpop.f32.mrb[0].mxu0
    %v382 = vadd.f32 %v176, %v381
    %v383 = vpop.f32.mrb[0].mxu0
    %v384 = vadd.f32 %v180, %v383
    %385 = vmatprep.mubr.bf16.mxu0 %v110
    %386 = vmatmul.mubr.bf16.gmra.mrb[0].mxu0 %v109
    %v387 = vpop.f32.mrb[0].mxu0
    %v388 = vadd.f32 %v176, %v387
    %v389 = vpop.f32.mrb[0].mxu0
    %v390 = vadd.f32 %v180, %v389
    %v391 = vpop.f32.mrb[0].mxu0
    %v392 = vadd.f32 %v176, %v391
    %v393 = vpop.f32.mrb[0].mxu0
    %v394 = vadd.f32 %v180, %v393
    %395 = vmatprep.mubr.bf16.mxu0 %v112
    %396 = vmatmul.mubr.bf16.gmra.mrb[0].mxu0 %v111
    %v397 = vpop.f32.mrb[0].mxu0
    %v398 = vadd.f32 %v176, %v397
    %v399 = vpop.f32.mrb[0].mxu0
    %v400 = vadd.f32 %v180, %v399
    %v401 = vpop.f32.mrb[0].mxu0
    %v402 = vadd.f32 %v176, %v401
    %v403 = vpop.f32.mrb[0].mxu0
    %v404 = vadd.f32 %v180, %v403
    %405 = vmatprep.mubr.bf16.mxu0 %v114
    %406 = vmatmul.mubr.bf16.gmra.mrb[0].mxu0 %v113
    %v407 = vpop.f32.mrb[0].mxu0
    %v408 = vadd.f32 %v176, %v407
    %v409 = vpop.f32.mrb[0].mxu0
    %v410 = vadd.f32 %v180, %v409
    %v411 = vpop.f32.mrb[0].mxu0
    %v412 = vadd.f32 %v176, %v411
    %v413 = vpop.f32.mrb[0].mxu0
    %v414 = vadd.f32 %v180, %v413
    %415 = vmatprep.mubr.bf16.mxu0 %v116
    %416 = vmatmul.mubr.bf16.gmra.mrb[0].mxu0 %v115
    %v417 = vpop.f32.mrb[0].mxu0
    %v418 = vadd.f32 %v176, %v417
    %v419 = vpop.f32.mrb[0].mxu0
    %v420 = vadd.f32 %v180, %v419
    %v421 = vpop.f32.mrb[0].mxu0
    %v422 = vadd.f32 %v176, %v421
    %v423 = vpop.f32.mrb[0].mxu0
    %v424 = vadd.f32 %v180, %v423
    %425 = vmatprep.mubr.bf16.mxu0 %v118
    %426 = vmatmul.mubr.bf16.gmra.mrb[0].mxu0 %v117
    %v427 = vpop.f32.mrb[0].mxu0
    %v428 = vadd.f32 %v176, %v427
    %v429 = vpop.f32.mrb[0].mxu0
    %v430 = vadd.f32 %v180, %v429
    %v431 = vpop.f32.mrb[0].mxu0
    %v432 = vadd.f32 %v176, %v431
    %v433 = vpop.f32.mrb[0].mxu0
    %v434 = vadd.f32 %v180, %v433
    %435 = vmatprep.mubr.bf16.mxu0 %v120
    %436 = vmatmul.mubr.bf16.gmra.mrb[0].mxu0 %v119
    %v437 = vpop.f32.mrb[0].mxu0
    %v438 = vadd.f32 %v176, %v437
    %v439 = vpop.f32.mrb[0].mxu0
    %v440 = vadd.f32 %v180, %v439
    %v441 = vpop.f32.mrb[0].mxu0
    %v442 = vadd.f32 %v176, %v441
    %v443 = vpop.f32.mrb[0].mxu0
    %v444 = vadd.f32 %v180, %v443
    %445 = vmatprep.mubr.bf16.mxu0 %v122
    %446 = vmatmul.mubr.bf16.gmra.mrb[0].mxu0 %v121
    %v447 = vpop.f32.mrb[0].mxu0
    %v448 = vadd.f32 %v176, %v447
    %v449 = vpop.f32.mrb[0].mxu0
    %v450 = vadd.f32 %v180, %v449
    %v451 = vpop.f32.mrb[0].mxu0
    %v452 = vadd.f32 %v176, %v451
    %v453 = vpop.f32.mrb[0].mxu0
    %v454 = vadd.f32 %v180, %v453
    %455 = vmatprep.mubr.bf16.mxu0 %v124
    %456 = vmatmul.mubr.bf16.gmra.mrb[0].mxu0 %v123
    %v457 = vpop.f32.mrb[0].mxu0
    %v458 = vadd.f32 %v176, %v457
    %v459 = vpop.f32.mrb[0].mxu0
    %v460 = vadd.f32 %v180, %v459
    %v461 = vpop.f32.mrb[0].mxu0
    %v462 = vadd.f32 %v176, %v461
    %v463 = vpop.f32.mrb[0].mxu0
    %v464 = vadd.f32 %v180, %v463
    %465 = vmatprep.mubr.bf16.mxu0 %v126
    %466 = vmatmul.mubr.bf16.gmra.mrb[0].mxu0 %v125
    %v467 = vpop.f32.mrb[0].mxu0
    %v468 = vadd.f32 %v176, %v467
    %v469 = vpop.f32.mrb[0].mxu0
    %v470 = vadd.f32 %v180, %v469
    %v471 = vpop.f32.mrb[0].mxu0
    %v472 = vadd.f32 %v176, %v471
    %v473 = vpop.f32.mrb[0].mxu0
    %v474 = vadd.f32 %v180, %v473
    %475 = vmatprep.mubr.bf16.mxu0 %v128
    %476 = vmatmul.mubr.bf16.gmra.mrb[0].mxu0 %v127
    %v477 = vpop.f32.mrb[0].mxu0
    %v478 = vadd.f32 %v176, %v477
    %v479 = vpop.f32.mrb[0].mxu0
    %v480 = vadd.f32 %v180, %v479
    %v481 = vpop.f32.mrb[0].mxu0
    %v482 = vadd.f32 %v176, %v481
    %v483 = vpop.f32.mrb[0].mxu0
    %v484 = vadd.f32 %v180, %v483
    %485 = vmatprep.mubr.bf16.mxu0 %v130
    %486 = vmatmul.mubr.bf16.gmra.mrb[0].mxu0 %v129
    %v487 = vpop.f32.mrb[0].mxu0
    %v488 = vadd.f32 %v176, %v487
    %v489 = vpop.f32.mrb[0].mxu0
    %v490 = vadd.f32 %v180, %v489
    %v491 = vpop.f32.mrb[0].mxu0
    %v492 = vadd.f32 %v176, %v491
    %v493 = vpop.f32.mrb[0].mxu0
    %v494 = vadd.f32 %v180, %v493
    %495 = vmatprep.mubr.bf16.mxu0 %v132
    %496 = vmatmul.mubr.bf16.gmra.mrb[0].mxu0 %v131
    %v497 = vpop.f32.mrb[0].mxu0
    %v498 = vadd.f32 %v176, %v497
    %v499 = vpop.f32.mrb[0].mxu0
    %v500 = vadd.f32 %v180, %v499
    %v501 = vpop.f32.mrb[0].mxu0
    %v502 = vadd.f32 %v176, %v501
    %v503 = vpop.f32.mrb[0].mxu0
    %v504 = vadd.f32 %v180, %v503
    %505 = vmatprep.mubr.bf16.mxu0 %v134
    %506 = vmatmul.mubr.bf16.gmra.mrb[0].mxu0 %v133
    %v507 = vpop.f32.mrb[0].mxu0
    %v508 = vadd.f32 %v176, %v507
    %v509 = vpop.f32.mrb[0].mxu0
    %v510 = vadd.f32 %v180, %v509
    %v511 = vpop.f32.mrb[0].mxu0
    %v512 = vadd.f32 %v176, %v511
    %v513 = vpop.f32.mrb[0].mxu0
    %v514 = vadd.f32 %v180, %v513
    %515 = vmatprep.mubr.bf16.mxu0 %v136
    %516 = vmatmul.mubr.bf16.gmra.mrb[0].mxu0 %v135
    %v517 = vpop.f32.mrb[0].mxu0
    %v518 = vadd.f32 %v176, %v517
    %v519 = vpop.f32.mrb[0].mxu0
    %v520 = vadd.f32 %v180, %v519
    %v521 = vpop.f32.mrb[0].mxu0
    %v522 = vadd.f32 %v176, %v521
    %v523 = vpop.f32.mrb[0].mxu0
    %v524 = vadd.f32 %v180, %v523
    %525 = vmatprep.mubr.bf16.mxu0 %v138
    %526 = vmatmul.mubr.bf16.gmra.mrb[0].mxu0 %v137
    %v527 = vpop.f32.mrb[0].mxu0
    %v528 = vadd.f32 %v176, %v527
    %v529 = vpop.f32.mrb[0].mxu0
    %v530 = vadd.f32 %v180, %v529
    %v531 = vpop.f32.mrb[0].mxu0
    %v532 = vadd.f32 %v176, %v531
    %v533 = vpop.f32.mrb[0].mxu0
    %v534 = vadd.f32 %v180, %v533
    %535 = vdwg.mxu0
    %v536 = vpack.c.bf16 %v382, %v378
    %v537 = vpack.c.bf16 %v384, %v380
    %v538 = vpack.c.bf16 %v392, %v388
    %v539 = vpack.c.bf16 %v394, %v390
    %v540 = vpack.c.bf16 %v402, %v398
    %v541 = vpack.c.bf16 %v404, %v400
    %v542 = vpack.c.bf16 %v412, %v408
    %v543 = vpack.c.bf16 %v414, %v410
    %v544 = vpack.c.bf16 %v422, %v418
    %v545 = vpack.c.bf16 %v424, %v420
    %v546 = vpack.c.bf16 %v432, %v428
    %v547 = vpack.c.bf16 %v434, %v430
    %v548 = vpack.c.bf16 %v442, %v438
    %v549 = vpack.c.bf16 %v444, %v440
    %v550 = vpack.c.bf16 %v452, %v448
    %v551 = vpack.c.bf16 %v454, %v450
    %v552 = vpack.c.bf16 %v462, %v458
    %v553 = vpack.c.bf16 %v464, %v460
    %v554 = vpack.c.bf16 %v472, %v468
    %v555 = vpack.c.bf16 %v474, %v470
    %v556 = vpack.c.bf16 %v482, %v478
    %v557 = vpack.c.bf16 %v484, %v480
    %v558 = vpack.c.bf16 %v492, %v488
    %v559 = vpack.c.bf16 %v494, %v490
    %v560 = vpack.c.bf16 %v502, %v498
    %v561 = vpack.c.bf16 %v504, %v500
    %v562 = vpack.c.bf16 %v512, %v508
    %v563 = vpack.c.bf16 %v514, %v510
    %v564 = vpack.c.bf16 %v522, %v518
    %v565 = vpack.c.bf16 %v524, %v520
    %v566 = vpack.c.bf16 %v532, %v528
    %v567 = vpack.c.bf16 %v534, %v530
    %v600 = vunpack.c.l.b16 %v536
    %v601 = vunpack.c.l.b16 %v537
    %v602 = vunpack.c.h.b16 %v536
    %v603 = vunpack.c.h.b16 %v537
    %v604 = vunpack.c.l.b16 %v538
    %v605 = vunpack.c.l.b16 %v539
    %v606 = vunpack.c.h.b16 %v538
    %v607 = vunpack.c.h.b16 %v539
    %v608 = vunpack.c.l.b16 %v540
    %v609 = vunpack.c.l.b16 %v541
    %v610 = vunpack.c.h.b16 %v540
    %v611 = vunpack.c.h.b16 %v541
    %v612 = vunpack.c.l.b16 %v542
    %v613 = vunpack.c.l.b16 %v543
    %v614 = vunpack.c.h.b16 %v542
    %v615 = vunpack.c.h.b16 %v543
    %v616 = vunpack.c.l.b16 %v544
    %v617 = vunpack.c.l.b16 %v545
    %v618 = vunpack.c.h.b16 %v544
    %v619 = vunpack.c.h.b16 %v545
    %v620 = vunpack.c.l.b16 %v546
    %v621 = vunpack.c.l.b16 %v547
    %v622 = vunpack.c.h.b16 %v546
    %v623 = vunpack.c.h.b16 %v547
    %v624 = vunpack.c.l.b16 %v548
    %v625 = vunpack.c.l.b16 %v549
    %v626 = vunpack.c.h.b16 %v548
    %v627 = vunpack.c.h.b16 %v549
    %v628 = vunpack.c.l.b16 %v550
    %v629 = vunpack.c.l.b16 %v551
    %v630 = vunpack.c.h.b16 %v550
    %v631 = vunpack.c.h.b16 %v551
    %v632 = vunpack.c.l.b16 %v552
    %v633 = vunpack.c.l.b16 %v553
    %v634 = vunpack.c.h.b16 %v552
    %v635 = vunpack.c.h.b16 %v553
    %v636 = vunpack.c.l.b16 %v554
    %v637 = vunpack.c.l.b16 %v555
    %v638 = vunpack.c.h.b16 %v554
    %v639 = vunpack.c.h.b16 %v555
    %v640 = vunpack.c.l.b16 %v556
    %v641 = vunpack.c.l.b16 %v557
    %v642 = vunpack.c.h.b16 %v556
    %v643 = vunpack.c.h.b16 %v557
    %v644 = vunpack.c.l.b16 %v558
    %v645 = vunpack.c.l.b16 %v559
    %v646 = vunpack.c.h.b16 %v558
    %v647 = vunpack.c.h.b16 %v559
    %v648 = vunpack.c.l.b16 %v560
    %v649 = vunpack.c.l.b16 %v561
    %v650 = vunpack.c.h.b16 %v560
    %v651 = vunpack.c.h.b16 %v561
    %v652 = vunpack.c.l.b16 %v562
    %v653 = vunpack.c.l.b16 %v563
    %v654 = vunpack.c.h.b16 %v562
    %v655 = vunpack.c.h.b16 %v563
    %v656 = vunpack.c.l.b16 %v564
    %v657 = vunpack.c.l.b16 %v565
    %v658 = vunpack.c.h.b16 %v564
    %v659 = vunpack.c.h.b16 %v565
    %v660 = vunpack.c.l.b16 %v566
    %v661 = vunpack.c.l.b16 %v567
    %v662 = vunpack.c.h.b16 %v566
    %v663 = vunpack.c.h.b16 %v567
    %v664 = vpack.c.b16 %v601, %v600
    %v665 = vpack.c.b16 %v603, %v602
    %v666 = vpack.c.b16 %v605, %v604
    %v667 = vpack.c.b16 %v607, %v606
    %v668 = vpack.c.b16 %v609, %v608
    %v669 = vpack.c.b16 %v611, %v610
    %v670 = vpack.c.b16 %v613, %v612
    %v671 = vpack.c.b16 %v615, %v614
    %v672 = vpack.c.b16 %v617, %v616
    %v673 = vpack.c.b16 %v619, %v618
    %v674 = vpack.c.b16 %v621, %v620
    %v675 = vpack.c.b16 %v623, %v622
    %v676 = vpack.c.b16 %v625, %v624
    %v677 = vpack.c.b16 %v627, %v626
    %v678 = vpack.c.b16 %v629, %v628
    %v679 = vpack.c.b16 %v631, %v630
    %v680 = vpack.c.b16 %v633, %v632
    %v681 = vpack.c.b16 %v635, %v634
    %v682 = vpack.c.b16 %v637, %v636
    %v683 = vpack.c.b16 %v639, %v638
    %v684 = vpack.c.b16 %v641, %v640
    %v685 = vpack.c.b16 %v643, %v642
    %v686 = vpack.c.b16 %v645, %v644
    %v687 = vpack.c.b16 %v647, %v646
    %v688 = vpack.c.b16 %v649, %v648
    %v689 = vpack.c.b16 %v651, %v650
    %v690 = vpack.c.b16 %v653, %v652
    %v691 = vpack.c.b16 %v655, %v654
    %v692 = vpack.c.b16 %v657, %v656
    %v693 = vpack.c.b16 %v659, %v658
    %v694 = vpack.c.b16 %v661, %v660
    %v695 = vpack.c.b16 %v663, %v662
    %728 = vst [vmem:[#allocation7] sm:$0xff] %v664
    %729 = vst [vmem:[#allocation7 + $0x8] sm:$0xff] %v665
    %730 = vst [vmem:[#allocation7 + $0x10] sm:$0xff] %v666
    %731 = vst [vmem:[#allocation7 + $0x18] sm:$0xff] %v667
    %732 = vst [vmem:[#allocation7 + $0x20] sm:$0xff] %v668
    %733 = vst [vmem:[#allocation7 + $0x28] sm:$0xff] %v669
    %734 = vst [vmem:[#allocation7 + $0x30] sm:$0xff] %v670
    %735 = vst [vmem:[#allocation7 + $0x38] sm:$0xff] %v671
    %736 = vst [vmem:[#allocation7 + $0x40] sm:$0xff] %v672
    %737 = vst [vmem:[#allocation7 + $0x48] sm:$0xff] %v673
    %738 = vst [vmem:[#allocation7 + $0x50] sm:$0xff] %v674
    %739 = vst [vmem:[#allocation7 + $0x58] sm:$0xff] %v675
    %740 = vst [vmem:[#allocation7 + $0x60] sm:$0xff] %v676
    %741 = vst [vmem:[#allocation7 + $0x68] sm:$0xff] %v677
    %742 = vst [vmem:[#allocation7 + $0x70] sm:$0xff] %v678
    %743 = vst [vmem:[#allocation7 + $0x78] sm:$0xff] %v679
    %744 = vst [vmem:[#allocation7 + $0x80] sm:$0xff] %v680
    %745 = vst [vmem:[#allocation7 + $0x88] sm:$0xff] %v681
    %746 = vst [vmem:[#allocation7 + $0x90] sm:$0xff] %v682
    %747 = vst [vmem:[#allocation7 + $0x98] sm:$0xff] %v683
    %748 = vst [vmem:[#allocation7 + $0xa0] sm:$0xff] %v684
    %749 = vst [vmem:[#allocation7 + $0xa8] sm:$0xff] %v685
    %750 = vst [vmem:[#allocation7 + $0xb0] sm:$0xff] %v686
    %751 = vst [vmem:[#allocation7 + $0xb8] sm:$0xff] %v687
    %752 = vst [vmem:[#allocation7 + $0xc0] sm:$0xff] %v688
    %753 = vst [vmem:[#allocation7 + $0xc8] sm:$0xff] %v689
    %754 = vst [vmem:[#allocation7 + $0xd0] sm:$0xff] %v690
    %755 = vst [vmem:[#allocation7 + $0xd8] sm:$0xff] %v691
    %756 = vst [vmem:[#allocation7 + $0xe0] sm:$0xff] %v692
    %757 = vst [vmem:[#allocation7 + $0xe8] sm:$0xff] %v693
    %758 = vst [vmem:[#allocation7 + $0xf0] sm:$0xff] %v694
    %759 = vst [vmem:[#allocation7 + $0xf8] sm:$0xff] %v695
    // Predicated region
    $region22: #{tpu_custom_call.1} parent=1 // pred_check
      _
    $region23: #{tpu_custom_call.1} parent=1 // pred_check_branch
      %761 = sbr.rel (0) target = $region25
    $region24: #{tpu_custom_call.1} parent=1 // pred_region
      %s763 = ssub.s32 4096, 4096
      %764 = vsyncadd [#allocation4], %s763
      %s765 = sshll.u32 [#allocation7], 4
      %s766 = int_to_ptr.vmem [resolvable:$true] %s765
      %771 = dma.vmem_to_hbm [thread:$0]  %s766, 4096, %s3, [#allocation4], 128, 128, 8
    $region25: #{tpu_custom_call.1} parent=1 // pred_fallthru
      _
    // Predicated region
    $region26: #{tpu_custom_call.1} parent=1 // pred_check
      _
    $region27: #{tpu_custom_call.1} parent=1 // pred_check_branch
      %773 = sbr.rel (0) target = $region29
    $region28: #{tpu_custom_call.1} parent=1 // pred_region
      %774 = dma.done [#allocation4], 4096
    $region29: #{tpu_custom_call.1} parent=1 // pred_fallthru
      _
    %775 = vsyncpa [#allocation3], 1
    %776 = vsyncpa [#allocation6], 1
    %777 = vsyncpa [#allocation4], 1

</llo_original>
